<compile_context>
chip_gen: v6e
topology: v6e:2x2x1
jax: 0.10.0
libtpu: 0.0.40
codegen_flags: <defaults>
</compile_context>

<pallas_src>
import functools

import jax
import jax.numpy as jnp
from jax.experimental import pallas as pl
from jax.experimental.pallas import tpu as pltpu

LANE = 128


def _msle_sum_kernel(yhat_ref, y_ref, out_ref, acc_ref, *,
                     tile_rows, acc_rows, steps_per_split, rows_valid,
                     full_blocks, has_edge):
    """Per-split sum of squared log-ratios, accumulated in (acc_rows, 128) f32."""
    p = pl.program_id(0)          # parallel split (megacore on v7x)
    k = pl.program_id(1)          # reduction steps within the split
    blk = p * steps_per_split + k  # logical block index

    @pl.when(k == 0)
    def _():
        acc_ref[...] = jnp.zeros_like(acc_ref)

    yh = yhat_ref[...].astype(jnp.float32)
    yt = y_ref[...].astype(jnp.float32)
    # One EUP log + one EUP reciprocal per element (instead of two logs):
    # log(yh/yt) == log(yh) - log(yt) up to ULP-level rounding.
    d = jnp.log(yh / yt)
    sq = d * d

    def _fold(x):
        # Fold the (tile_rows, 128) block onto acc_rows accumulator rows:
        # pure VPU adds with ILP across acc_rows//8 independent vregs,
        # no per-step cross-lane reduce.
        return x.reshape(tile_rows // acc_rows, acc_rows, LANE).sum(axis=0)

    if has_edge:
        @pl.when(blk < full_blocks)
        def _():
            # Interior blocks: unmasked accumulate (no iota/compare/select).
            acc_ref[...] += _fold(sq)

        @pl.when(blk >= full_blocks)
        def _():
            # Only the partial edge block and any phantom (clamped) block pay
            # for the mask.  Keep it a select, not a multiply: the padded edge
            # region holds unspecified values -> log may produce NaN/inf there.
            row0 = blk * tile_rows
            row_ids = row0 + jax.lax.broadcasted_iota(
                jnp.int32, (tile_rows, LANE), 0)
            acc_ref[...] += _fold(jnp.where(row_ids < rows_valid, sq, 0.0))
    else:
        acc_ref[...] += _fold(sq)

    @pl.when(k == steps_per_split - 1)
    def _():
        # Single cross-lane/sublane reduce per split, final step only.
        out_ref[...] = jnp.sum(acc_ref[...], keepdims=True)


def msle_loss(y_hat, y, *, target_block_bytes=4 << 20):
    """mean((log(y_hat) - log(y))**2) over every element, via a Pallas kernel."""
    assert y_hat.shape == y.shape, "y_hat and y must have the same shape"
    total = y_hat.size

    # Only f32 / bf16 are tiled natively; everything else goes through f32.
    if y_hat.dtype not in (jnp.float32, jnp.bfloat16):
        y_hat = y_hat.astype(jnp.float32)
    if y.dtype not in (jnp.float32, jnp.bfloat16):
        y = y.astype(jnp.float32)

    yh_flat = jnp.reshape(y_hat, (-1,))
    y_flat = jnp.reshape(y, (-1,))

    main = (total // LANE) * LANE
    rem = total - main

    # Tiny (<128 elem) tail handled with plain JAX.
    tail_sum = jnp.float32(0.0)
    if rem:
        # TODO(synk): when total % 128 != 0 the [:main] slice below can cost one
        # extra HBM pass; removing it needs pl.ANY refs + manual DMA with a flat
        # element-index mask.
        dt = (jnp.log(yh_flat[main:].astype(jnp.float32))
              - jnp.log(y_flat[main:].astype(jnp.float32)))
        tail_sum = jnp.sum(dt * dt)

    if main == 0:
        return tail_sum / jnp.float32(total)

    rows = main // LANE
    if rem:
        yh_main, y_main = yh_flat[:main], y_flat[:main]
    else:
        yh_main, y_main = yh_flat, y_flat  # no slice/copy in the common case
    yh2 = jnp.reshape(yh_main, (rows, LANE))
    y2 = jnp.reshape(y_main, (rows, LANE))

    def _sub(dt):
        return 16 if dt == jnp.bfloat16 else 8

    def _round_up(x, m):
        return ((x + m - 1) // m) * m

    sub = max(_sub(yh2.dtype), _sub(y2.dtype))
    if rows < sub:
        # Too small to tile; kernel/grid overhead would dominate anyway.
        d = jnp.log(yh2.astype(jnp.float32)) - jnp.log(y2.astype(jnp.float32))
        return (jnp.sum(d * d) + tail_sum) / jnp.float32(total)

    itemsize = max(jnp.dtype(yh2.dtype).itemsize, jnp.dtype(y2.dtype).itemsize)
    # ~4 MiB per (widest-dtype) input block: amortizes per-grid-step overhead
    # at v7x's 3.2 TB/s; bf16 inputs get 2x the rows for the same HBM bytes.
    # 2 inputs x 2 pipeline buffers stays well under v7x's 64 MiB VMEM.
    target_rows = max(sub, target_block_bytes // (LANE * itemsize))
    tile_rows = min(_round_up(target_rows, sub), (rows // sub) * sub)

    # Largest accumulator height that divides the tile: up to 8 independent
    # f32 vregs of accumulation instead of one serial-add chain per step.
    acc_rows = 8
    for cand in (64, 32, 16):
        if tile_rows % cand == 0:
            acc_rows = cand
            break

    total_blocks = (rows + tile_rows - 1) // tile_rows
    full_blocks = rows // tile_rows          # blocks with no padded rows
    # Unconditional 2-way split whenever there is more than one block, so the
    # second TensorCore (v7x megacore) is never left idle on an odd block
    # count; the possible phantom last step is masked out in-kernel.
    n_splits = 2 if total_blocks >= 2 else 1
    steps_per_split = (total_blocks + n_splits - 1) // n_splits
    padded_blocks = n_splits * steps_per_split
    has_edge = padded_blocks != full_blocks  # partial edge or phantom steps

    kernel = functools.partial(
        _msle_sum_kernel,
        tile_rows=tile_rows,
        acc_rows=acc_rows,
        steps_per_split=steps_per_split,
        rows_valid=rows,
        full_blocks=full_blocks,
        has_edge=has_edge,
    )

    last_block = total_blocks - 1

    def _in_index_map(p, k):
        # Clamp phantom steps onto the last real block (their contribution is
        # masked to zero in-kernel), keeping every DMA in bounds.
        return (jnp.minimum(p * steps_per_split + k, last_block), 0)

    bytes_per_step = tile_rows * LANE * (
        jnp.dtype(yh2.dtype).itemsize + jnp.dtype(y2.dtype).itemsize)
    # 2 double-buffered inputs + elementwise temporaries; capped below v7x's
    # 64 MiB VMEM (v5e/v6e have 128 MiB physical, so this is always safe).
    vmem_limit = int(min(max(4 * bytes_per_step, 16 << 20), 48 << 20))

    partials = pl.pallas_call(
        kernel,
        out_shape=jax.ShapeDtypeStruct((n_splits, 1), jnp.float32),
        grid_spec=pltpu.PrefetchScalarGridSpec(
            num_scalar_prefetch=0,
            grid=(n_splits, steps_per_split),
            in_specs=[
                pl.BlockSpec((tile_rows, LANE), _in_index_map),
                pl.BlockSpec((tile_rows, LANE), _in_index_map),
            ],
            out_specs=pl.BlockSpec((1, 1), lambda p, k: (p, 0)),
            scratch_shapes=[pltpu.VMEM((acc_rows, LANE), jnp.float32)],
        ),
        compiler_params=pltpu.CompilerParams(
            # "parallel" keeps the same code valid on 1-TC chips (v5e/v6e)
            # while letting v7x megacore shard the split axis across cores.
            dimension_semantics=("parallel", "arbitrary"),
            vmem_limit_bytes=vmem_limit,
        ),
    )(yh2, y2)

    return (jnp.sum(partials) + tail_sum) / jnp.float32(total)


if __name__ == "__main__":
    key = jax.random.PRNGKey(0)
    k1, k2, k3, k4 = jax.random.split(key, 4)

    # NCHW inputs, strictly positive (module uses plain log, so inputs > 0).
    x_shape = (2, 4, 16, 16)
    y_hat = jax.random.uniform(k1, x_shape, jnp.float32, minval=0.1, maxval=5.0)
    y = jax.random.uniform(k2, x_shape, jnp.float32, minval=0.1, maxval=5.0)

    loss = msle_loss(y_hat, y)
    jax.block_until_ready(loss)
    ref = jnp.mean((jnp.log(y_hat) - jnp.log(y)) ** 2)
    assert jnp.allclose(loss, ref, rtol=1e-5, atol=1e-6), (loss, ref)

    # Ragged case: non-multiple-of-128 element count and an odd block count —
    # exercises the 2-way split with a phantom (clamped+masked) step, the
    # masked partial edge block, and the plain-JAX tail.
    r_shape = (20, 130)
    yh_r = jax.random.uniform(k3, r_shape, jnp.float32, minval=0.1, maxval=5.0)
    y_r = jax.random.uniform(k4, r_shape, jnp.float32, minval=0.1, maxval=5.0)
    loss_r = msle_loss(yh_r, y_r, target_block_bytes=4096)
    jax.block_until_ready(loss_r)
    ref_r = jnp.mean((jnp.log(yh_r) - jnp.log(y_r)) ** 2)
    assert jnp.allclose(loss_r, ref_r, rtol=1e-5, atol=1e-6), (loss_r, ref_r)

    print("KERNEL_OK")
</pallas_src>

<mosaic_0001>
module attributes {stable_mosaic.version = 11 : i64} {
  func.func @_msle_sum_kernel(%arg0: i32, %arg1: i32, %arg2: memref<16x128xf32, #tpu.memory_space<vmem>>, %arg3: memref<16x128xf32, #tpu.memory_space<vmem>>, %arg4: memref<1x1xf32, #tpu.memory_space<vmem>>, %arg5: memref<16x128xf32, #tpu.memory_space<vmem>>) attributes {dimension_semantics = [#tpu.dimension_semantics<parallel>, #tpu.dimension_semantics<arbitrary>], iteration_bounds = array<i64: 1, 1>, scalar_prefetch = 0 : i64, scratch_operands = 1 : i64, tpu.core_type = #tpu.core_type<tc>, window_params = [{transform_indices = @transform_0, window_bounds = array<i64: 16, 128>}, {transform_indices = @transform_1, window_bounds = array<i64: 16, 128>}, {transform_indices = @transform_2, window_bounds = array<i64: 1, 1>}]} {
    %c0_i32 = arith.constant 0 : i32
    %0 = arith.cmpi eq, %arg1, %c0_i32 : i32
    %1 = arith.extui %0 : i1 to i32
    %c0_i32_0 = arith.constant 0 : i32
    %2 = arith.cmpi ne, %1, %c0_i32_0 : i32
    scf.if %2 {
      %cst_10 = arith.constant 0.000000e+00 : f32
      %16 = vector.broadcast %cst_10 : f32 to vector<16x128xf32>
      %c0_11 = arith.constant 0 : index
      %c0_12 = arith.constant 0 : index
      %17 = vector.load %arg5[%c0_11, %c0_12] : memref<16x128xf32, #tpu.memory_space<vmem>>, vector<16x128xf32>
      tpu.vector_store %arg5[%c0_11, %c0_12], %16 {strides = array<i32>} : memref<16x128xf32, #tpu.memory_space<vmem>>, vector<16x128xf32>,
    } else {
    }
    %c0 = arith.constant 0 : index
    %c0_1 = arith.constant 0 : index
    %3 = vector.load %arg2[%c0, %c0_1] : memref<16x128xf32, #tpu.memory_space<vmem>>, vector<16x128xf32>
    %c0_2 = arith.constant 0 : index
    %c0_3 = arith.constant 0 : index
    %4 = vector.load %arg3[%c0_2, %c0_3] : memref<16x128xf32, #tpu.memory_space<vmem>>, vector<16x128xf32>
    %5 = arith.divf %3, %4 : vector<16x128xf32>
    %6 = math.log %5 : vector<16x128xf32>
    %7 = arith.mulf %6, %6 : vector<16x128xf32>
    %c0_4 = arith.constant 0 : index
    %c0_5 = arith.constant 0 : index
    %8 = vector.load %arg5[%c0_4, %c0_5] : memref<16x128xf32, #tpu.memory_space<vmem>>, vector<16x128xf32>
    %9 = vector.shape_cast %7 : vector<16x128xf32> to vector<1x16x128xf32>
    %cst = arith.constant dense<0.000000e+00> : vector<16x128xf32>
    %10 = vector.multi_reduction <add>, %9, %cst [0] : vector<1x16x128xf32> to vector<16x128xf32>
    %11 = arith.addf %8, %10 : vector<16x128xf32>
    %c0_6 = arith.constant 0 : index
    %c0_7 = arith.constant 0 : index
    %12 = vector.load %arg5[%c0_6, %c0_7] : memref<16x128xf32, #tpu.memory_space<vmem>>, vector<16x128xf32>
    tpu.vector_store %arg5[%c0_6, %c0_7], %11 {strides = array<i32>} : memref<16x128xf32, #tpu.memory_space<vmem>>, vector<16x128xf32>,
    %c0_i32_8 = arith.constant 0 : i32
    %13 = arith.cmpi eq, %arg1, %c0_i32_8 : i32
    %14 = arith.extui %13 : i1 to i32
    %c0_i32_9 = arith.constant 0 : i32
    %15 = arith.cmpi ne, %14, %c0_i32_9 : i32
    scf.if %15 {
      %c0_10 = arith.constant 0 : index
      %c0_11 = arith.constant 0 : index
      %16 = vector.load %arg5[%c0_10, %c0_11] : memref<16x128xf32, #tpu.memory_space<vmem>>, vector<16x128xf32>
      %17 = vector.shape_cast %16 : vector<16x128xf32> to vector<1x16x128xf32>
      %cst_12 = arith.constant dense<0.000000e+00> : vector<1xf32>
      %18 = vector.multi_reduction <add>, %17, %cst_12 [1, 2] : vector<1x16x128xf32> to vector<1xf32>
      %19 = vector.shape_cast %18 : vector<1xf32> to vector<1x1x1xf32>
      %20 = vector.extract %19[0, 0, 0] : f32 from vector<1x1x1xf32>
      %21 = vector.broadcast %20 : f32 to vector<1x1xf32>
      %c0_13 = arith.constant 0 : index
      %c0_14 = arith.constant 0 : index
      %22 = vector.load %arg4[%c0_13, %c0_14] : memref<1x1xf32, #tpu.memory_space<vmem>>, vector<1x1xf32>
      tpu.vector_store %arg4[%c0_13, %c0_14], %21 {strides = array<i32>} : memref<1x1xf32, #tpu.memory_space<vmem>>, vector<1x1xf32>,
    } else {
    }
    return
  }
  func.func @transform_0(%arg0: i32, %arg1: i32) -> (i32, i32) {
    %c1_i32 = arith.constant 1 : i32
    %0 = arith.muli %arg0, %c1_i32 : i32
    %1 = arith.addi %0, %arg1 : i32
    %c0_i32 = arith.constant 0 : i32
    %2 = arith.minsi %1, %c0_i32 : i32
    %c0_i32_0 = arith.constant 0 : i32
    %c0_i32_1 = arith.constant 0 : i32
    return %2, %c0_i32_0 : i32, i32
  }
  func.func @transform_1(%arg0: i32, %arg1: i32) -> (i32, i32) {
    %c1_i32 = arith.constant 1 : i32
    %0 = arith.muli %arg0, %c1_i32 : i32
    %1 = arith.addi %0, %arg1 : i32
    %c0_i32 = arith.constant 0 : i32
    %2 = arith.minsi %1, %c0_i32 : i32
    %c0_i32_0 = arith.constant 0 : i32
    %c0_i32_1 = arith.constant 0 : i32
    return %2, %c0_i32_0 : i32, i32
  }
  func.func @transform_2(%arg0: i32, %arg1: i32) -> (i32, i32) {
    %c0_i32 = arith.constant 0 : i32
    %c0_i32_0 = arith.constant 0 : i32
    return %arg0, %c0_i32 : i32, i32
  }
}

</mosaic_0001>

<llo_original>
// kernel: tpu_custom_call.1
$region0: #{tpu_custom_call.1}
  #allocation0 [shape = 'u32[]', space=smem, size = 0x4, offset = 0x4, fixed_abs, tag = 'smem constant byte address 0x4 - core index']
  #allocation1 [shape = 'u32[144,128]{1,0:T(1,128)}', space=vmem, size = 0x12000, scoped, tag = 'internal scratch']
  #allocation2 [shape = 'f32[16,128]{1,0:T(8,128)}', space=vmem, size = 0x2000, scoped, tag = 'scratch operand']
  %s0 = inlined_call_operand.hbm [shape: f32[16,128], index: 0, kind: input, shape index: {}]
  %s1 = inlined_call_operand.hbm [shape: f32[16,128], index: 1, kind: input, shape index: {}]
  %s2 = inlined_call_operand.hbm [shape: f32[1,1], index: 2, kind: output, shape index: {}]
  %s3 = sld [smem:[#allocation0]]
  $region34: #{tpu_custom_call.1} parent=0
    _
  %s5 = ssub.s32 1, %s3
  %s6 = scalar_select 0, %s5, %s3
  $region1: #{tpu_custom_call.1} parent=0
    #allocation3 [shape = 'u8[8192]{0}', space=vmem, size = 0x2000, scoped, tag = 'input window, operand 0, single buffered']
    #allocation4 [shape = 's32[1]{0}', space=sflag, size = 0x4, scoped, tag = 'scoped memory for tpu_custom_call.1']
    #allocation5 [shape = 's32[1]{0}', space=sflag, size = 0x4, scoped, tag = 'scoped memory for tpu_custom_call.1']
    #allocation6 [shape = 'u8[8192]{0}', space=vmem, size = 0x2000, scoped, tag = 'input window, operand 1, single buffered']
    #allocation7 [shape = 's32[1]{0}', space=sflag, size = 0x4, scoped, tag = 'scoped memory for tpu_custom_call.1']
    #allocation8 [shape = 'u8[512]{0}', space=vmem, size = 0x400, scoped, tag = 'output window, operand 0, single buffered']
    %7 = vsyncpa [#allocation4], 0
    %8 = vsyncpa [#allocation7], 0
    %9 = vsyncpa [#allocation5], 0
    // Predicated region
    $region2: #{tpu_custom_call.1} parent=1 // pred_check
      _
    $region3: #{tpu_custom_call.1} parent=1 // pred_check_branch
      %11 = sbr.rel (0) target = $region5
    $region4: #{tpu_custom_call.1} parent=1 // pred_region
      %s12 = sadd.s32 0, 0
      %p13 = scmp.lt.s32.totalorder %s12, 0
      %s14 = scalar_select %p13, %s12, 0
      %s15 = smul.u32 2, %s14
      %s17 = ssub.s32 256, 256
      %18 = vsyncadd [#allocation4], %s17
      %s19 = smul.addr %s15, 128
      %s20 = scalar_lea.hbm %s0, %s19
      %s21 = sshll.u32 [#allocation3], 4
      %s22 = int_to_ptr.vmem [resolvable:$true] %s21
      %27 = dma.hbm_to_vmem [thread:$0]  %s20, 256, %s22, [#allocation4], 128, 128, 8
    $region5: #{tpu_custom_call.1} parent=1 // pred_fallthru
      _
    // Predicated region
    $region6: #{tpu_custom_call.1} parent=1 // pred_check
      _
    $region7: #{tpu_custom_call.1} parent=1 // pred_check_branch
      %29 = sbr.rel (0) target = $region9
    $region8: #{tpu_custom_call.1} parent=1 // pred_region
      %s30 = sadd.s32 0, 0
      %p31 = scmp.lt.s32.totalorder %s30, 0
      %s32 = scalar_select %p31, %s30, 0
      %s33 = smul.u32 2, %s32
      %s35 = ssub.s32 256, 256
      %36 = vsyncadd [#allocation7], %s35
      %s37 = smul.addr %s33, 128
      %s38 = scalar_lea.hbm %s1, %s37
      %s39 = sshll.u32 [#allocation6], 4
      %s40 = int_to_ptr.vmem [resolvable:$true] %s39
      %45 = dma.hbm_to_vmem [thread:$0]  %s38, 256, %s40, [#allocation7], 128, 128, 8
    $region9: #{tpu_custom_call.1} parent=1 // pred_fallthru
      _
    // Predicated region
    $region10: #{tpu_custom_call.1} parent=1 // pred_check
      _
    $region11: #{tpu_custom_call.1} parent=1 // pred_check_branch
      %47 = sbr.rel (0) target = $region13
    $region12: #{tpu_custom_call.1} parent=1 // pred_region
      %48 = dma.done [#allocation4], 256
    $region13: #{tpu_custom_call.1} parent=1 // pred_fallthru
      _
    // Predicated region
    $region14: #{tpu_custom_call.1} parent=1 // pred_check
      _
    $region15: #{tpu_custom_call.1} parent=1 // pred_check_branch
      %50 = sbr.rel (0) target = $region17
    $region16: #{tpu_custom_call.1} parent=1 // pred_region
      %51 = dma.done [#allocation7], 256
    $region17: #{tpu_custom_call.1} parent=1 // pred_fallthru
      _
    %s52 = sadd.s32 0, 0
    %p53 = scmp.lt.s32.totalorder %s52, 0
    %s54 = scalar_select %p53, %s52, 0
    %s55 = smul.u32 2, %s54
    %s56 = sadd.s32 0, 0
    %p57 = scmp.lt.s32.totalorder %s56, 0
    %s58 = scalar_select %p57, %s56, 0
    %s59 = smul.u32 2, %s58
    %p60 = scmp.eq.s32.totalorder 0, 0
    // Predicated region
    $region18: #{tpu_custom_call.1} parent=1 // pred_check
      %p61 = pneg %p60
    $region19: #{tpu_custom_call.1} parent=1 // pred_check_branch
      %63 = sbr.rel (%p61) target = $region21
    $region20: #{tpu_custom_call.1} parent=1 // pred_region
      %64 = vst [vmem:[#allocation2] sm:$0xff] 0.0
      %65 = vst [vmem:[#allocation2 + $0x8] sm:$0xff] 0.0
    $region21: #{tpu_custom_call.1} parent=1 // pred_fallthru
      _
    %v66 = vld [vmem:[#allocation3] sm:$0xff]
    %v67 = vld [vmem:[#allocation3 + $0x8] sm:$0xff]
    %v68 = vld [vmem:[#allocation6] sm:$0xff]
    %v69 = vld [vmem:[#allocation6 + $0x8] sm:$0xff]
    %v70 = vrcp.pop %v68
    %v71 = vmul.f32 %v66, %v70
    %v72 = vrcp.pop %v69
    %v73 = vmul.f32 %v67, %v72
    %v74 = vlog2.pop %v71
    %v75 = vmul.f32 %v74, 0.6931472
    %v76 = vlog2.pop %v73
    %v77 = vmul.f32 %v76, 0.6931472
    %v78 = vmul.f32 %v75, %v75
    %v79 = vmul.f32 %v77, %v77
    %v80 = vld [vmem:[#allocation2] sm:$0xff]
    %v81 = vld [vmem:[#allocation2 + $0x8] sm:$0xff]
    %v82 = vadd.f32 %v78, 0.0
    %v83 = vadd.f32 %v79, 0.0
    %v84 = vadd.f32 %v80, %v82
    %v85 = vadd.f32 %v81, %v83
    %86 = vst [vmem:[#allocation2] sm:$0xff] %v84
    %87 = vst [vmem:[#allocation2 + $0x8] sm:$0xff] %v85
    // Predicated region
    $region22: #{tpu_custom_call.1} parent=1 // pred_check
      %p88 = pneg %p60
    $region23: #{tpu_custom_call.1} parent=1 // pred_check_branch
      %90 = sbr.rel (%p88) target = $region25
    $region24: #{tpu_custom_call.1} parent=1 // pred_region
      %v91 = vld [vmem:[#allocation2] sm:$0xff]
      %v92 = vld [vmem:[#allocation2 + $0x8] sm:$0xff]
      %v93 = vadd.f32 %v91, %v92
      %94 = vadd.xlane.f32.xlu0 %v93
      %v95 = vpop.xlane.xlu0 %94
      %v96 = vrot.slane %v95, 4
      %v97 = vadd.f32 %v95, %v96
      %v98 = vrot.slane %v97, 2
      %v99 = vadd.f32 %v97, %v98
      %v100 = vrot.slane %v99, 1
      %v101 = vadd.f32 %v99, %v100
      %s102 = vtos %v101
      %v103 = vstv %s102
      %vm104 = vcmask 0
      %105 = vst.msk [vmem:[#allocation8] sm:$0x1] %vm104, %v103
    $region25: #{tpu_custom_call.1} parent=1 // pred_fallthru
      _
    // Predicated region
    $region26: #{tpu_custom_call.1} parent=1 // pred_check
      _
    $region27: #{tpu_custom_call.1} parent=1 // pred_check_branch
      %107 = sbr.rel (0) target = $region29
    $region28: #{tpu_custom_call.1} parent=1 // pred_region
      %s109 = ssub.s32 16, 16
      %110 = vsyncadd [#allocation5], %s109
      %s112 = sshll.u32 [#allocation8], 4
      %s113 = int_to_ptr.vmem [resolvable:$true] %s112
      %115 = dma.vmem_to_hbm [thread:$0]  %s113, 16, %s2, [#allocation5]
    $region29: #{tpu_custom_call.1} parent=1 // pred_fallthru
      _
    // Predicated region
    $region30: #{tpu_custom_call.1} parent=1 // pred_check
      _
    $region31: #{tpu_custom_call.1} parent=1 // pred_check_branch
      %117 = sbr.rel (0) target = $region33
    $region32: #{tpu_custom_call.1} parent=1 // pred_region
      %118 = dma.done [#allocation5], 16
    $region33: #{tpu_custom_call.1} parent=1 // pred_fallthru
      _
    %119 = vsyncpa [#allocation4], 1
    %120 = vsyncpa [#allocation7], 1
    %121 = vsyncpa [#allocation5], 1

</llo_original>
